<compile_context>
chip_gen: v5e
topology: v5e:2x2
jax: 0.10.0
libtpu: 0.0.40
codegen_flags: <defaults>
</compile_context>

<pallas_src>
import math

import jax
import jax.numpy as jnp
from jax import lax
from jax.experimental import pallas as pl
from jax.experimental.pallas import tpu as pltpu


def _round_up(a, b):
    return ((a + b - 1) // b) * b


def _vmem_budget_bytes():
    """Generation-aware VMEM budget: ~48 MiB on v7x, ~96 MiB on v5e/v6e."""
    cap = 64 << 20  # conservative fallback = v7x per-TensorCore VMEM
    get_info = getattr(pltpu, "get_tpu_info", None)
    if get_info is not None:
        try:
            info = get_info()
            for attr in ("vmem_capacity_bytes", "vmem_bytes", "vmem_size_bytes"):
                v = getattr(info, attr, None)
                if v:
                    cap = int(v)
                    break
        except Exception:
            pass
    return min(cap * 3 // 4, 100 << 20)


def _mask_embedding_kernel(x_ref, s_ref, emb_ref, out_ref):
    """One grid step.

    x_ref   : (TN, 1)  int32    token feature ids
    s_ref   : (TN, 3)  float32  per-token [mask_s, mask1, mask2] (exact f32)
    emb_ref : (TF, D)  bfloat16 raw embedding rows of contraction tile k
    out_ref : (TN, W)  float32  lane-dense slab [E*ms | E*m1 | E*m2 | pad],
                                resident accumulator across the k grid axis
    """
    k = pl.program_id(1)
    tn = x_ref.shape[0]
    tf, d = emb_ref.shape

    @pl.when(k == 0)
    def _():
        out_ref[...] = jnp.zeros_like(out_ref)

    x = x_ref[...]                                              # (tn, 1) int32
    iota_f = lax.broadcasted_iota(jnp.int32, (tn, tf), 1) + k * tf
    # One-hot gather on the MXU. 0/1 are exact in bf16, so only the embedding
    # entries are bf16-rounded; accumulation is f32.
    onehot = (x == iota_f).astype(jnp.bfloat16)                 # (tn, tf)
    e = jnp.dot(onehot, emb_ref[...],
                preferred_element_type=jnp.float32)             # (tn, d) f32
    # TODO(synk): for very large F replace the one-hot MXU gather with a
    # scalar-prefetched DMA row gather (PrefetchScalarGridSpec + pl.Element
    # index_map); one-hot flops scale O(N*F*D) vs the O(N*D) actually needed.

    s = s_ref[...]                                              # (tn, 3) f32
    # VPU broadcast-multiplies: free filler under the MXU.
    out_ref[:, 0:d] += e * s[:, 0:1]
    out_ref[:, d:2 * d] += e * s[:, 1:2]
    out_ref[:, 2 * d:3 * d] += e * s[:, 2:3]


def mask_embedding_forward(x, embedding, mask_weight_i, mask_weight_s,
                           mask_weight_j, *, mask_weight_init_value,
                           mask_scaling, temp=1.0, thre=1.0, ticket=False):
    orig_shape = x.shape
    N = 1
    for s in orig_shape:
        N *= int(s)
    F, D = embedding.shape

    # ---- per-FEATURE mask math (O(F), plain JAX) ----------------------------
    scaling = float(mask_scaling) * (1.0 + math.exp(-float(mask_weight_init_value)))
    mwi = mask_weight_i[:, 0]
    mws = mask_weight_s[:, 0]
    mwj = mask_weight_j[:, 0]
    if ticket:
        mi = (mwi > 0.0).astype(jnp.float32)
        ms = (mws > 0.0).astype(jnp.float32)
        mj = (mwj > 0.0).astype(jnp.float32)
    else:
        mi = jax.nn.sigmoid(temp * mwi)
        ms = jax.nn.sigmoid(temp * mws)
        mj = jax.nn.sigmoid(temp * mwj)
    mi = scaling * mi
    ms = scaling * ms
    mj = scaling * mj
    g_s = (ms > thre).astype(jnp.float32)        # == sign(relu(ms - thre))
    m1 = ms * g_s + mi * (1.0 - g_s)
    m2 = ms * g_s + mj * (1.0 - g_s)
    scales3 = jnp.stack([ms, m1, m2], axis=1).astype(jnp.float32)   # (F, 3)

    # ---- per-token scales: tiny O(N*3) gather in the wrapper, kept f32 ------
    x_flat = x.reshape(N).astype(jnp.int32)
    s_tok = scales3[x_flat]                                          # (N, 3)

    # ---- lane-dense joint output padding ------------------------------------
    W = _round_up(3 * D, 128)     # joint 3*D padding (not per-part)
    Dl = _round_up(D, 128)        # lane-padded width of one table tile in VMEM

    budget = _vmem_budget_bytes()
    headroom = 8 << 20

    # ---- token tiling: >= 2 token blocks when possible (v7x megacore) -------
    if N <= 8:
        TN = 8
    elif N >= 1024:
        TN = 512
    else:
        TN = min(512, _round_up((N + 1) // 2, 8))
    # Shrink the token tile if the f32 output slab alone would blow the budget
    # (only relevant for very large D).
    while TN > 8 and 2 * TN * (W + 256) * 4 + headroom > budget:
        TN = _round_up(max(8, TN // 2), 8)
    Np = _round_up(N, TN)
    if Np != N:
        x_flat = jnp.pad(x_flat, (0, Np - N))        # padded tokens -> feature 0
        s_tok = jnp.pad(s_tok, ((0, Np - N), (0, 0)))
    x2d = x_flat.reshape(Np, 1)

    # ---- contraction tiling: keep the whole table resident when it fits -----
    fixed = (2 * TN * 128 * 4        # id blocks (double-buffered, lane-padded)
             + 2 * TN * 128 * 4      # per-token scale blocks
             + 2 * TN * W * 4)       # f32 output tile
    F8 = _round_up(F, 8)
    resident = 2 * F8 * Dl * 2 + TN * F8 * 8   # bf16 table x2 + one-hot temps
    if fixed + resident + headroom <= budget:
        # Single contraction tile: table block index is constant across the
        # whole grid, so it is DMA'd from HBM only once.
        # TODO(synk): pipeline_mode=pl.Buffered(1) on the table spec would also
        # halve its VMEM footprint; omitted to stay conservative across versions.
        TF = F8
    else:
        TF = 512 if F8 >= 512 else _round_up(F8, 256)   # 256-multiples feed 2x256 MXU
    Fp = _round_up(F, TF)

    emb_bf = embedding.astype(jnp.bfloat16)
    if Fp != F:
        emb_bf = jnp.pad(emb_bf, ((0, Fp - F), (0, 0)))

    grid = (Np // TN, Fp // TF)

    est = fixed + 2 * TF * Dl * 2 + TN * TF * 8 + headroom
    vmem_limit = int(min(max(est, 32 << 20), budget))

    out = pl.pallas_call(
        _mask_embedding_kernel,
        out_shape=jax.ShapeDtypeStruct((Np, W), jnp.float32),
        grid=grid,
        in_specs=[
            pl.BlockSpec((TN, 1), lambda i, k: (i, 0)),
            pl.BlockSpec((TN, 3), lambda i, k: (i, 0)),
            pl.BlockSpec((TF, D), lambda i, k: (k, 0)),
        ],
        out_specs=pl.BlockSpec((TN, W), lambda i, k: (i, 0)),
        compiler_params=pltpu.CompilerParams(
            dimension_semantics=("parallel", "arbitrary"),
            vmem_limit_bytes=vmem_limit),
    )(x2d, s_tok, emb_bf)

    out = out[:N]
    out_shape = tuple(orig_shape) + (D,)
    out_s = out[:, 0:D].reshape(out_shape)
    out1 = out[:, D:2 * D].reshape(out_shape)
    out2 = out[:, 2 * D:3 * D].reshape(out_shape)
    return out_s, out1, out2


class MaskEmbedding:
    """JAX/Pallas re-implementation of modules/multiMask2.py::MaskEmbedding (forward only)."""

    def __init__(self, feature_num, latent_dim,
                 mask_weight_init_value=0.0, mask_scaling=1, *, key):
        self.feature_num = feature_num
        self.latent_dim = latent_dim
        self.mask_weight_init_value = mask_weight_init_value
        self.mask_scaling = mask_scaling

        # xavier_uniform_ on (feature_num, latent_dim)
        limit = (6.0 / (feature_num + latent_dim)) ** 0.5
        self.embedding = jax.random.uniform(
            key, (feature_num, latent_dim),
            minval=-limit, maxval=limit, dtype=jnp.float32)

        init = jnp.full((feature_num, 1), mask_weight_init_value, jnp.float32)
        self.mask_weight_i = init
        self.mask_weight_s = init
        self.mask_weight_j = init

    def forward(self, x, temp=1.0, thre=1.0, ticket=False):
        # TODO(synk): LBSign's custom backward (straight-through estimator) is a
        # training-time autograd rule; only the forward semantics are implemented.
        return mask_embedding_forward(
            x, self.embedding, self.mask_weight_i, self.mask_weight_s,
            self.mask_weight_j,
            mask_weight_init_value=self.mask_weight_init_value,
            mask_scaling=self.mask_scaling,
            temp=temp, thre=thre, ticket=ticket)


def _reference_forward(mod, x, temp=1.0, thre=1.0, ticket=False):
    """Plain-JAX f32 reference matching the PyTorch forward."""
    scaling = float(mod.mask_scaling) * (
        1.0 + math.exp(-float(mod.mask_weight_init_value)))
    embed = mod.embedding[x]                     # (..., D)
    mwi = mod.mask_weight_i[x]                   # (..., 1)
    mws = mod.mask_weight_s[x]
    mwj = mod.mask_weight_j[x]
    if ticket:
        mi, ms, mj = [(w > 0).astype(jnp.float32) for w in (mwi, mws, mwj)]
    else:
        mi, ms, mj = [jax.nn.sigmoid(temp * w) for w in (mwi, mws, mwj)]
    mi, ms, mj = scaling * mi, scaling * ms, scaling * mj
    g_s = jnp.sign(jax.nn.relu(ms - thre))
    mask1 = ms * g_s + mi * (1 - g_s)
    mask2 = ms * g_s + mj * (1 - g_s)
    return embed * ms, embed * mask1, embed * mask2


if __name__ == "__main__":
    key = jax.random.PRNGKey(0)
    k_emb, k_x, k_i, k_s, k_j = jax.random.split(key, 5)

    feature_num = 32
    latent_dim = 32
    batch, seq = 2, 8

    mod = MaskEmbedding(feature_num, latent_dim,
                        mask_weight_init_value=0.0, mask_scaling=1, key=k_emb)
    # Non-constant mask weights so both sides of the threshold gate are hit.
    mod.mask_weight_i = jax.random.normal(k_i, (feature_num, 1), jnp.float32)
    mod.mask_weight_s = jax.random.normal(k_s, (feature_num, 1), jnp.float32)
    mod.mask_weight_j = jax.random.normal(k_j, (feature_num, 1), jnp.float32)

    x = jax.random.randint(k_x, (batch, seq), 0, feature_num, dtype=jnp.int32)

    for kwargs in ({"temp": 2.0, "thre": 1.0, "ticket": False},
                   {"temp": 1.0, "thre": 0.5, "ticket": True}):
        outs = jax.block_until_ready(mod.forward(x, **kwargs))
        refs = _reference_forward(mod, x, **kwargs)
        for o, r in zip(outs, refs):
            assert o.shape == (batch, seq, latent_dim)
            # The embedding table is bf16 on the MXU path, so compare with a
            # bf16-level tolerance (masks themselves stay exact f32).
            assert jnp.allclose(o, r, atol=1e-2, rtol=1e-2), "mismatch vs reference"

    print("KERNEL_OK")
</pallas_src>

<mosaic_0001>
module attributes {stable_mosaic.version = 11 : i64} {
  func.func @_mask_embedding_kernel(%arg0: i32, %arg1: i32, %arg2: memref<8x1xi32, #tpu.memory_space<vmem>>, %arg3: memref<8x3xf32, #tpu.memory_space<vmem>>, %arg4: memref<32x32xbf16, #tpu.memory_space<vmem>>, %arg5: memref<8x128xf32, #tpu.memory_space<vmem>>) attributes {dimension_semantics = [#tpu.dimension_semantics<parallel>, #tpu.dimension_semantics<arbitrary>], iteration_bounds = array<i64: 2, 1>, scalar_prefetch = 0 : i64, scratch_operands = 0 : i64, tpu.core_type = #tpu.core_type<tc>, window_params = [{transform_indices = @transform_0, window_bounds = array<i64: 8, 1>}, {transform_indices = @transform_1, window_bounds = array<i64: 8, 3>}, {transform_indices = @transform_2, window_bounds = array<i64: 32, 32>}, {transform_indices = @transform_3, window_bounds = array<i64: 8, 128>}]} {
    %c0_i32 = arith.constant 0 : i32
    %0 = arith.cmpi eq, %arg1, %c0_i32 : i32
    %1 = arith.extui %0 : i1 to i32
    %c0_i32_0 = arith.constant 0 : i32
    %2 = arith.cmpi ne, %1, %c0_i32_0 : i32
    scf.if %2 {
      %cst_16 = arith.constant 0.000000e+00 : f32
      %34 = vector.broadcast %cst_16 : f32 to vector<8x128xf32>
      %c0_17 = arith.constant 0 : index
      %c0_18 = arith.constant 0 : index
      %35 = vector.load %arg5[%c0_17, %c0_18] : memref<8x128xf32, #tpu.memory_space<vmem>>, vector<8x128xf32>
      tpu.vector_store %arg5[%c0_17, %c0_18], %34 {strides = array<i32>} : memref<8x128xf32, #tpu.memory_space<vmem>>, vector<8x128xf32>,
    } else {
    }
    %c0 = arith.constant 0 : index
    %c0_1 = arith.constant 0 : index
    %3 = vector.load %arg2[%c0, %c0_1] : memref<8x1xi32, #tpu.memory_space<vmem>>, vector<8x1xi32>
    %4 = tpu.iota {dimensions = array<i32: 1>} : vector<8x32xi32>
    %c32_i32 = arith.constant 32 : i32
    %5 = arith.muli %arg1, %c32_i32 : i32
    %6 = vector.broadcast %5 : i32 to vector<8x32xi32>
    %7 = arith.addi %4, %6 : vector<8x32xi32>
    %8 = vector.broadcast %3 : vector<8x1xi32> to vector<8x32xi32>
    %9 = arith.cmpi eq, %8, %7 : vector<8x32xi32>
    %10 = arith.extui %9 : vector<8x32xi1> to vector<8x32xi32>
    %11 = arith.sitofp %10 : vector<8x32xi32> to vector<8x32xf32>
    %12 = arith.truncf %11 : vector<8x32xf32> to vector<8x32xbf16>
    %c0_2 = arith.constant 0 : index
    %c0_3 = arith.constant 0 : index
    %13 = vector.load %arg4[%c0_2, %c0_3] : memref<32x32xbf16, #tpu.memory_space<vmem>>, vector<32x32xbf16>
    %cst = arith.constant dense<0.000000e+00> : vector<8x32xf32>
    %14 = tpu.matmul %12, %13, %cst {dimension_numbers = #tpu.dot_dimension_numbers<[1], [0], [0], [1], [0, 0, 1, 1], [], []>} : vector<8x32xbf16>, vector<32x32xbf16>, vector<8x32xf32> -> vector<8x32xf32>
    %c0_4 = arith.constant 0 : index
    %c0_5 = arith.constant 0 : index
    %15 = vector.load %arg3[%c0_4, %c0_5] : memref<8x3xf32, #tpu.memory_space<vmem>>, vector<8x3xf32>
    %c0_6 = arith.constant 0 : index
    %c0_7 = arith.constant 0 : index
    %16 = vector.load %arg5[%c0_6, %c0_7] : memref<8x128xf32, #tpu.memory_space<vmem>>, vector<8x32xf32>
    %17 = vector.extract_strided_slice %15 {offsets = [0, 0], sizes = [8, 1], strides = [1, 1]} : vector<8x3xf32> to vector<8x1xf32>
    %18 = vector.broadcast %17 : vector<8x1xf32> to vector<8x32xf32>
    %19 = arith.mulf %14, %18 : vector<8x32xf32>
    %20 = arith.addf %16, %19 : vector<8x32xf32>
    %c0_8 = arith.constant 0 : index
    %c0_9 = arith.constant 0 : index
    %21 = vector.load %arg5[%c0_8, %c0_9] : memref<8x128xf32, #tpu.memory_space<vmem>>, vector<8x32xf32>
    tpu.vector_store %arg5[%c0_8, %c0_9], %20 {strides = array<i32>} : memref<8x128xf32, #tpu.memory_space<vmem>>, vector<8x32xf32>,
    %c0_10 = arith.constant 0 : index
    %c32 = arith.constant 32 : index
    %22 = vector.load %arg5[%c0_10, %c32] : memref<8x128xf32, #tpu.memory_space<vmem>>, vector<8x32xf32>
    %23 = vector.extract_strided_slice %15 {offsets = [0, 1], sizes = [8, 1], strides = [1, 1]} : vector<8x3xf32> to vector<8x1xf32>
    %24 = vector.broadcast %23 : vector<8x1xf32> to vector<8x32xf32>
    %25 = arith.mulf %14, %24 : vector<8x32xf32>
    %26 = arith.addf %22, %25 : vector<8x32xf32>
    %c0_11 = arith.constant 0 : index
    %c32_12 = arith.constant 32 : index
    %27 = vector.load %arg5[%c0_11, %c32_12] : memref<8x128xf32, #tpu.memory_space<vmem>>, vector<8x32xf32>
    tpu.vector_store %arg5[%c0_11, %c32_12], %26 {strides = array<i32>} : memref<8x128xf32, #tpu.memory_space<vmem>>, vector<8x32xf32>,
    %c0_13 = arith.constant 0 : index
    %c64 = arith.constant 64 : index
    %28 = vector.load %arg5[%c0_13, %c64] : memref<8x128xf32, #tpu.memory_space<vmem>>, vector<8x32xf32>
    %29 = vector.extract_strided_slice %15 {offsets = [0, 2], sizes = [8, 1], strides = [1, 1]} : vector<8x3xf32> to vector<8x1xf32>
    %30 = vector.broadcast %29 : vector<8x1xf32> to vector<8x32xf32>
    %31 = arith.mulf %14, %30 : vector<8x32xf32>
    %32 = arith.addf %28, %31 : vector<8x32xf32>
    %c0_14 = arith.constant 0 : index
    %c64_15 = arith.constant 64 : index
    %33 = vector.load %arg5[%c0_14, %c64_15] : memref<8x128xf32, #tpu.memory_space<vmem>>, vector<8x32xf32>
    tpu.vector_store %arg5[%c0_14, %c64_15], %32 {strides = array<i32>} : memref<8x128xf32, #tpu.memory_space<vmem>>, vector<8x32xf32>,
    return
  }
  func.func @transform_0(%arg0: i32, %arg1: i32) -> (i32, i32) {
    %c0_i32 = arith.constant 0 : i32
    %c0_i32_0 = arith.constant 0 : i32
    return %arg0, %c0_i32 : i32, i32
  }
  func.func @transform_1(%arg0: i32, %arg1: i32) -> (i32, i32) {
    %c0_i32 = arith.constant 0 : i32
    %c0_i32_0 = arith.constant 0 : i32
    return %arg0, %c0_i32 : i32, i32
  }
  func.func @transform_2(%arg0: i32, %arg1: i32) -> (i32, i32) {
    %c0_i32 = arith.constant 0 : i32
    %c0_i32_0 = arith.constant 0 : i32
    return %arg1, %c0_i32 : i32, i32
  }
  func.func @transform_3(%arg0: i32, %arg1: i32) -> (i32, i32) {
    %c0_i32 = arith.constant 0 : i32
    %c0_i32_0 = arith.constant 0 : i32
    return %arg0, %c0_i32 : i32, i32
  }
}

</mosaic_0001>

<llo_original>
// kernel: tpu_custom_call.1
$region0: #{tpu_custom_call.1}
  #allocation0 [shape = 'u32[]', space=smem, size = 0x4, offset = 0x4, fixed_abs, tag = 'smem constant byte address 0x4 - core index']
  #allocation1 [shape = 'u32[72,128]{1,0:T(1,128)}', space=vmem, size = 0x9000, scoped, tag = 'internal scratch']
  %s0 = inlined_call_operand.vmem [shape: s32[16,1], index: 0, kind: input, shape index: {}]
  %s1 = inlined_call_operand.vmem [shape: f32[16,3], index: 1, kind: input, shape index: {}]
  %s2 = inlined_call_operand.vmem [shape: bf16[32,32], index: 2, kind: input, shape index: {}]
  %s3 = inlined_call_operand.hbm [shape: f32[16,128], index: 3, kind: output, shape index: {}]
  %s4 = sld [smem:[#allocation0]]
  $region49: #{tpu_custom_call.1} parent=0
    _
  %s6 = ssub.s32 1, %s4
  %s7 = scalar_select 0, %s6, %s4
  $region1: #{tpu_custom_call.1} parent=0
    #allocation2 [shape = 'u8[8192]{0}', space=vmem, size = 0x2000, scoped, tag = 'output window, operand 0']
    #allocation3 [shape = 's32[2]{0}', space=sflag, size = 0x8, scoped, tag = 'scoped memory for tpu_custom_call.1']
    %8 = vsyncpa [#allocation3], 0
    %s9 = scalar_lea.sflag [#allocation3], 1
    %10 = vsyncpa %s9, 0
    loop: start=0, step=1, limit=4
    $region2: #{tpu_custom_call.1} parent=1 // loop_pre_header
      _
    $region3: #{tpu_custom_call.1} parent=1 // loop_header
      %s12 = sphi 0, %s16
      %p13 = scmp.ge.s32.totalorder %s12, 4
      %s19 = sphi 0, %s31
      %s20 = sphi 0, %s27
      %s21 = sphi 0, %s19
      %s22 = sphi 0, %s20
      %s23 = sphi 0, %s21
      %s24 = sphi 0, %s22
      %s34 = sphi 0, %s36
      %s37 = sphi 0, %s34
      %s38 = sphi 0, %s37
      %s54 = sphi 0, %s38
      %s60 = sphi 0, %s62
      %s63 = sphi 0, %s60
      %s64 = sphi 0, %s63
      %s80 = sphi 0, %s64
      %s86 = sphi 0, %s88
      %s89 = sphi 0, %s86
      %s90 = sphi 0, %s89
      %s106 = sphi 0, %s90
      %s112 = sphi 0, %s114
      %s115 = sphi 0, %s112
      %s116 = sphi 0, %s115
      %s132 = sphi 0, %s116
    $region4: #{tpu_custom_call.1} parent=1 // loop_header_branch
      %15 = sbr.rel (%p13) target = $region8
    $region5: #{tpu_custom_call.1} parent=1 // loop_body
      %s17 = ssub.s32 %s12, 1
      %s18 = ssub.s32 %s12, 2
      %s25 = sadd.s32 1, %s20
      %p26 = scmp.ge.s32.totalorder %s25, 1
      %s27 = scalar_select %p26, 0, %s25
      %s28 = sadd.s32 1, %s19
      %s29 = scalar_select %p26, %s28, %s19
      %p30 = scmp.ge.s32.totalorder %s29, 2
      %s31 = scalar_select %p30, 0, %s29
      %s32 = ssub.s32 %s19, %s31
      %p33 = scmp.eq.s32.totalorder %s32, 0
      %s35 = sadd.s32 %s34, 1
      %s36 = scalar_select %p33, %s34, %s35
      %p39 = pneg %p33
      %p40 = scmp.eq.s32.totalorder %s12, 1
      %p41 = por %p39, %p40
      %p42 = scmp.ne.s32.totalorder %s34, %s37
      %p43 = scmp.eq.s32.totalorder %s12, 0
      %p44 = por %p42, %p43
      %p45 = scmp.ne.s32.totalorder %s34, %s37
      %p46 = scmp.eq.s32.totalorder %s17, 1
      %p47 = por %p45, %p46
      %p48 = scmp.ne.s32.totalorder %s37, %s38
      %p49 = scmp.eq.s32.totalorder %s17, 0
      %p50 = por %p48, %p49
      %p51 = scmp.ne.s32.totalorder %s37, %s38
      %p52 = scmp.eq.s32.totalorder %s18, 1
      %p53 = por %p51, %p52
      %p55 = scmp.ne.s32.totalorder %s38, %s54
      %p56 = scmp.eq.s32.totalorder %s18, 0
      %p57 = por %p55, %p56
      %s58 = ssub.s32 %s19, %s31
      %p59 = scmp.eq.s32.totalorder %s58, 0
      %s61 = sadd.s32 %s60, 1
      %s62 = scalar_select %p59, %s60, %s61
      %p65 = pneg %p59
      %p66 = scmp.eq.s32.totalorder %s12, 1
      %p67 = por %p65, %p66
      %p68 = scmp.ne.s32.totalorder %s60, %s63
      %p69 = scmp.eq.s32.totalorder %s12, 0
      %p70 = por %p68, %p69
      %p71 = scmp.ne.s32.totalorder %s60, %s63
      %p72 = scmp.eq.s32.totalorder %s17, 1
      %p73 = por %p71, %p72
      %p74 = scmp.ne.s32.totalorder %s63, %s64
      %p75 = scmp.eq.s32.totalorder %s17, 0
      %p76 = por %p74, %p75
      %p77 = scmp.ne.s32.totalorder %s63, %s64
      %p78 = scmp.eq.s32.totalorder %s18, 1
      %p79 = por %p77, %p78
      %p81 = scmp.ne.s32.totalorder %s64, %s80
      %p82 = scmp.eq.s32.totalorder %s18, 0
      %p83 = por %p81, %p82
      %s84 = ssub.s32 %s20, %s27
      %p85 = scmp.eq.s32.totalorder %s84, 0
      %s87 = sadd.s32 %s86, 1
      %s88 = scalar_select %p85, %s86, %s87
      %p91 = pneg %p85
      %p92 = scmp.eq.s32.totalorder %s12, 1
      %p93 = por %p91, %p92
      %p94 = scmp.ne.s32.totalorder %s86, %s89
      %p95 = scmp.eq.s32.totalorder %s12, 0
      %p96 = por %p94, %p95
      %p97 = scmp.ne.s32.totalorder %s86, %s89
      %p98 = scmp.eq.s32.totalorder %s17, 1
      %p99 = por %p97, %p98
      %p100 = scmp.ne.s32.totalorder %s89, %s90
      %p101 = scmp.eq.s32.totalorder %s17, 0
      %p102 = por %p100, %p101
      %p103 = scmp.ne.s32.totalorder %s89, %s90
      %p104 = scmp.eq.s32.totalorder %s18, 1
      %p105 = por %p103, %p104
      %p107 = scmp.ne.s32.totalorder %s90, %s106
      %p108 = scmp.eq.s32.totalorder %s18, 0
      %p109 = por %p107, %p108
      %s110 = ssub.s32 %s19, %s31
      %p111 = scmp.eq.s32.totalorder %s110, 0
      %s113 = sadd.s32 %s112, 1
      %s114 = scalar_select %p111, %s112, %s113
      %p117 = pneg %p111
      %p118 = scmp.eq.s32.totalorder %s12, 1
      %p119 = por %p117, %p118
      %p120 = scmp.ne.s32.totalorder %s112, %s115
      %p121 = scmp.eq.s32.totalorder %s12, 0
      %p122 = por %p120, %p121
      %p123 = scmp.ne.s32.totalorder %s112, %s115
      %p124 = scmp.eq.s32.totalorder %s17, 1
      %p125 = por %p123, %p124
      %p126 = scmp.ne.s32.totalorder %s115, %s116
      %p127 = scmp.eq.s32.totalorder %s17, 0
      %p128 = por %p126, %p127
      %p129 = scmp.ne.s32.totalorder %s115, %s116
      %p130 = scmp.eq.s32.totalorder %s18, 1
      %p131 = por %p129, %p130
      %p133 = scmp.ne.s32.totalorder %s116, %s132
      %p134 = scmp.eq.s32.totalorder %s18, 0
      %p135 = por %p133, %p134
      %p136 = scmp.le.s32.totalorder 1, %s12
      %p137 = scmp.lt.s32.totalorder %s12, 3
      %p138 = pnand %p136, %p137
      %p139 = pneg %p138
      // Predicated region
      $region9: #{tpu_custom_call.1} parent=5 // pred_check
        _
      $region10: #{tpu_custom_call.1} parent=5 // pred_check_branch
        %141 = sbr.rel (%p138) target = $region12
      $region11: #{tpu_custom_call.1} parent=5 // pred_region
        %s142 = ssub.s32 %s12, 1
        // Predicated region
        $region13: #{tpu_custom_call.1} parent=11 // pred_check
          %p143 = pneg %p102
        $region14: #{tpu_custom_call.1} parent=11 // pred_check_branch
          %145 = sbr.rel (%p143) target = $region16
        $region15: #{tpu_custom_call.1} parent=11 // pred_region
          %s146 = smul.u32 4, %s22
          %p147 = scmp.lt.s32.totalorder %s146, 3
          %s148 = scalar_select %p147, %s146, 3
          %s149 = smul.addr %s148, 4
          %s150 = scalar_lea.vmem %s2, %s149
          %s151 = smul.u32 4, %s22
        $region16: #{tpu_custom_call.1} parent=11 // pred_fallthru
          _
      $region12: #{tpu_custom_call.1} parent=5 // pred_fallthru
        _
      %p152 = scmp.lt.s32.totalorder %s12, 2
      // Predicated region
      $region17: #{tpu_custom_call.1} parent=5 // pred_check
        %p153 = pneg %p152
      $region18: #{tpu_custom_call.1} parent=5 // pred_check_branch
        %155 = sbr.rel (%p153) target = $region20
      $region19: #{tpu_custom_call.1} parent=5 // pred_region
        // Predicated region
        $region21: #{tpu_custom_call.1} parent=19 // pred_check
          %p156 = pneg %p44
        $region22: #{tpu_custom_call.1} parent=19 // pred_check_branch
          %158 = sbr.rel (%p156) target = $region24
        $region23: #{tpu_custom_call.1} parent=19 // pred_region
          %p159 = scmp.lt.s32.totalorder %s19, 1
          %s160 = scalar_select %p159, %s19, 1
          %s161 = smul.addr %s160, 8
          %s162 = scalar_lea.vmem %s0, %s161
        $region24: #{tpu_custom_call.1} parent=19 // pred_fallthru
          _
        // Predicated region
        $region25: #{tpu_custom_call.1} parent=19 // pred_check
          %p163 = pneg %p70
        $region26: #{tpu_custom_call.1} parent=19 // pred_check_branch
          %165 = sbr.rel (%p163) target = $region28
        $region27: #{tpu_custom_call.1} parent=19 // pred_region
          %p166 = scmp.lt.s32.totalorder %s19, 1
          %s167 = scalar_select %p166, %s19, 1
          %s168 = smul.addr %s167, 8
          %s169 = scalar_lea.vmem %s1, %s168
        $region28: #{tpu_custom_call.1} parent=19 // pred_fallthru
          _
      $region20: #{tpu_custom_call.1} parent=5 // pred_fallthru
        _
      %p170 = scmp.le.s32.totalorder 1, %s12
      %p171 = scmp.lt.s32.totalorder %s12, 3
      %p172 = pnand %p170, %p171
      %p173 = pneg %p172
      // Predicated region
      $region29: #{tpu_custom_call.1} parent=5 // pred_check
        _
      $region30: #{tpu_custom_call.1} parent=5 // pred_check_branch
        %175 = sbr.rel (%p172) target = $region32
      $region31: #{tpu_custom_call.1} parent=5 // pred_region
        %s176 = ssub.s32 %s12, 1
        %p177 = scmp.lt.s32.totalorder %s21, 1
        %s178 = scalar_select %p177, %s21, 1
        %s179 = smul.addr %s178, 8
        %s180 = scalar_lea.vmem %s0, %s179
        %p181 = pneg %p50
        %p182 = pneg %p47
        %p183 = scmp.lt.s32.totalorder %s21, 1
        %s184 = scalar_select %p183, %s21, 1
        %s185 = smul.addr %s184, 8
        %s186 = scalar_lea.vmem %s1, %s185
        %p187 = pneg %p76
        %p188 = pneg %p73
        %s189 = smul.u32 4, %s22
        %p190 = scmp.lt.s32.totalorder %s189, 3
        %s191 = scalar_select %p190, %s189, 3
        %s192 = smul.addr %s191, 4
        %s193 = scalar_lea.vmem %s2, %s192
        %p194 = pneg %p102
        %p195 = pneg %p99
        %p196 = pneg %p128
        %p197 = pneg %p125
        %s198 = sand.u32 %s115, 1
        %s199 = scalar_lea.sflag [#allocation3], %s198
        %s200 = sand.u32 %s115, 1
        %s201 = smul.addr %s200, 8
        %s202 = scalar_lea.vmem [#allocation2], %s201
        %p203 = scmp.lt.s32.totalorder %s21, 1
        %s204 = scalar_select %p203, %s21, 1
        %s205 = smul.addr %s204, 8
        %s206 = scalar_lea.vmem %s0, %s205
        %p207 = scmp.lt.s32.totalorder %s21, 1
        %s208 = scalar_select %p207, %s21, 1
        %s209 = smul.addr %s208, 8
        %s210 = scalar_lea.vmem %s1, %s209
        %s211 = smul.u32 4, %s22
        %p212 = scmp.lt.s32.totalorder %s211, 3
        %s213 = scalar_select %p212, %s211, 3
        %s214 = smul.addr %s213, 4
        %s215 = scalar_lea.vmem %s2, %s214
        %s216 = smul.u32 4, %s22
        %p218 = scmp.eq.s32.totalorder %s22, 0
        // Predicated region
        $region33: #{tpu_custom_call.1} parent=31 // pred_check
          %p219 = pneg %p218
        $region34: #{tpu_custom_call.1} parent=31 // pred_check_branch
          %221 = sbr.rel (%p219) target = $region36
        $region35: #{tpu_custom_call.1} parent=31 // pred_region
          %222 = vst [vmem:[%s202] sm:$0xff] 0.0
        $region36: #{tpu_custom_call.1} parent=31 // pred_fallthru
          _
        %v223 = vld [vmem:[%s206] sm:$0xff]
        %v224 = vlaneseq
        %v225 = vand.u32 %v224, 127
        %s226 = smul.u32 %s22, 32
        %v227 = vstv %s226
        %v228 = vadd.s32 %v225, %v227
        %229 = vset.pattern.permute.xlu0 0
        %230 = vperm.xlu0 %229, %v223
        %v231 = vpop.permute.xlu0 %230
        %vm232 = vcmp.eq.s32.totalorder %v231, %v228
        %v233 = vsel %vm232, 1, 0
        %v234 = vcvt.s32.f32 %v233
        %v235 = vpack.c.bf16 %v234, %v234
        %v236 = vld [vmem:[%s215] sm:$0xf]
        %v237 = vld [vmem:[%s215 + $0x4] sm:$0xf]
        %v238 = vld [vmem:[%s215 + $0x8] sm:$0xf]
        %v239 = vld [vmem:[%s215 + $0xc] sm:$0xf]
        %v244 = vunpack.c.l.b16 %v236
        %v245 = vunpack.c.l.b16 %v237
        %v246 = vunpack.c.l.b16 %v238
        %v247 = vunpack.c.l.b16 %v239
        %v248 = vpack.c.b16 %v245, %v244
        %v249 = vpack.c.b16 %v247, %v246
        %vm252 = vcmask 261120
        %v254 = vsel %vm252, %v235, 0
        %256 = vmatpush.bf16.msra.mxu0 0
        %257 = vmatpush.bf16.msra.mxu0 0
        %258 = vmatpush.bf16.msra.mxu0 0
        %259 = vmatpush.bf16.msra.mxu0 0
        %260 = vmatpush.bf16.msra.mxu0 0
        %261 = vmatpush.bf16.msra.mxu0 0
        %262 = vmatpush.bf16.msra.mxu0 %v249
        %263 = vmatpush.bf16.msra.mxu0 %v248
        %264 = vmatmul.bf16.gmra.mxu0 %v254
        %v265 = vpop.f32.mrf.mxu0
        %v266 = vadd.f32 0.0, %v265
        %v267 = vpop.f32.mrf.mxu0
        %268 = vdwg.mxu0
        %v269 = vld [vmem:[%s210] sm:$0xff]
        %v270 = vld [vmem:[%s202] sm:$0xff]
        %272 = vset.pattern.permute.xlu0 0
        %273 = vperm.xlu0 %272, %v269
        %v274 = vpop.permute.xlu0 %273
        %v276 = vmul.f32 %v266, %v274
        %v277 = vadd.f32 %v270, %v276
        %278 = vst.msk [vmem:[%s202] sm:$0xff] %vm252, %v277
        %v279 = vld [vmem:[%s202] sm:$0xff]
        %280 = vset.pattern.permute.xlu0 1
        %281 = vperm.xlu0 %280, %v269
        %v282 = vpop.permute.xlu0 %281
        %v284 = vmul.f32 %v266, %v282
        %286 = vrot.lane.b32.xlu0 %v284, 32
        %v287 = vpop.permute.xlu0 %286
        %v289 = vadd.f32 %v279, %v287
        %vm290 = vcmask 523520
        %291 = vst.msk [vmem:[%s202] sm:$0xff] %vm290, %v289
        %v292 = vld [vmem:[%s202] sm:$0xff]
        %293 = vset.pattern.permute.xlu0 2
        %294 = vperm.xlu0 %293, %v269
        %v295 = vpop.permute.xlu0 %294
        %v297 = vmul.f32 %v266, %v295
        %299 = vrot.lane.b32.xlu0 %v297, 64
        %v300 = vpop.permute.xlu0 %299
        %v302 = vadd.f32 %v292, %v300
        %vm303 = vcmask 785920
        %304 = vst.msk [vmem:[%s202] sm:$0xff] %vm303, %v302
        %s305 = sand.u32 %s115, 1
        %s306 = scalar_lea.sflag [#allocation3], %s305
        %s307 = sand.u32 %s115, 1
        %s308 = smul.addr %s307, 8
        %s309 = scalar_lea.vmem [#allocation2], %s308
        // Predicated region
        $region37: #{tpu_custom_call.1} parent=31 // pred_check
          %p310 = pneg %p125
        $region38: #{tpu_custom_call.1} parent=31 // pred_check_branch
          %312 = sbr.rel (%p310) target = $region40
        $region39: #{tpu_custom_call.1} parent=31 // pred_region
          %314 = vsyncadd %s306, 0
          %s315 = smul.addr %s21, 8
          %s316 = scalar_lea.hbm %s3, %s315
          %s318 = sshll.u32 %s309, 4
          %s319 = int_to_ptr.vmem [resolvable:$true] %s318
          %s320 = sshll.u32 %s316, 4
          %s321 = int_to_ptr.hbm [resolvable:$true] %s320
          %323 = dma.vmem_to_hbm [thread:$0]  %s319, 128, %s321, %s306
        $region40: #{tpu_custom_call.1} parent=31 // pred_fallthru
          _
      $region32: #{tpu_custom_call.1} parent=5 // pred_fallthru
        _
      %p324 = scmp.le.s32.totalorder 2, %s12
      // Predicated region
      $region41: #{tpu_custom_call.1} parent=5 // pred_check
        %p325 = pneg %p324
      $region42: #{tpu_custom_call.1} parent=5 // pred_check_branch
        %327 = sbr.rel (%p325) target = $region44
      $region43: #{tpu_custom_call.1} parent=5 // pred_region
        %s328 = ssub.s32 %s12, 2
        // Predicated region
        $region45: #{tpu_custom_call.1} parent=43 // pred_check
          %p329 = pneg %p131
        $region46: #{tpu_custom_call.1} parent=43 // pred_check_branch
          %331 = sbr.rel (%p329) target = $region48
        $region47: #{tpu_custom_call.1} parent=43 // pred_region
          %s332 = sand.u32 %s116, 1
          %s333 = scalar_lea.sflag [#allocation3], %s332
          %s334 = sand.u32 %s116, 1
          %s335 = smul.addr %s334, 8
          %s336 = scalar_lea.vmem [#allocation2], %s335
          %338 = dma.done %s333, 128
        $region48: #{tpu_custom_call.1} parent=43 // pred_fallthru
          _
      $region44: #{tpu_custom_call.1} parent=5 // pred_fallthru
        _
    $region6: #{tpu_custom_call.1} parent=1 // loop_footer
      %s16 = sadd.s32 1, %s12
    $region7: #{tpu_custom_call.1} parent=1 // loop_footer_branch
      %11 = sbr.rel target = $region3
    $region8: #{tpu_custom_call.1} parent=1 // loop_exit
      _
    %339 = vsyncpa [#allocation3], 1
    %s340 = scalar_lea.sflag [#allocation3], 1
    %341 = vsyncpa %s340, 1

</llo_original>
